<compile_context>
chip_gen: v5e
topology: v5e:2x2
jax: 0.10.0
libtpu: 0.0.40
codegen_flags: <defaults>
</compile_context>

<pallas_src>
import jax
import jax.numpy as jnp
from jax.experimental import pallas as pl
from jax.experimental.pallas import tpu as pltpu

# Hyperparameters implied by the module (n_step=5 since output stacks h_[1..5]).
n_step = 5
batch_size = 2
emb_size = 16
n_hidden = 32
n_class = 32

GATE_LANES = 4 * n_hidden            # 128 (gate order [F, I, O, C] along lanes)
GATE_ORDER_L1 = ("F", "I", "O", "C")       # sigmoid, sigmoid, sigmoid, tanh
GATE_ORDER_L2 = ("F_", "I_", "O_", "C_")

# Packed-parameter slab layout (rows x 128 lanes, every chunk 8-row aligned).
R_T = 0                               # (n_class, 4H)  = Emb @ W1x + b1
R_W1H = 32                            # (H, 4H)        recurrent weights, layer 1
R_W2H2 = 64                           # (H, 4H)        layer-2 weights acting on h_ (prev h2)
R_W2H1 = 96                           # (H, 4H)        layer-2 weights acting on h1 (current)
R_B2 = 128                            # (1, 4H)        layer-2 bias (rows 129..135 zero pad)
R_WOUT = 136                          # (H, 128)       output weights, lanes >= n_class zero
R_BOUT = 168                          # (1, 128)       output bias,    lanes >= n_class zero
SLAB_ROWS = 176


def lstm_kernel(ids_ref, slab_ref, out_ref):
    H = n_hidden
    G = GATE_LANES

    # ---- Static, 8-row-aligned views into the single packed parameter slab -
    T = slab_ref[R_T:R_T + n_class, :]            # (n_class, 4H)
    w1h = slab_ref[R_W1H:R_W1H + H, :]            # (H, 4H)
    w2h2 = slab_ref[R_W2H2:R_W2H2 + H, :]         # (H, 4H)
    w2h1 = slab_ref[R_W2H1:R_W2H1 + H, :]         # (H, 4H)
    wout = slab_ref[R_WOUT:R_WOUT + H, :]         # (H, 128), lanes >= n_class are 0
    # Hoist bias broadcasts out of the unrolled loop (broadcast is not CSE'd).
    b2 = jnp.broadcast_to(slab_ref[R_B2:R_B2 + 1, :], (batch_size, G))
    bout = jnp.broadcast_to(slab_ref[R_BOUT:R_BOUT + 1, :], (batch_size, G))

    # ---- One-hot embedding + input projection: xw = onehot @ (Emb@W1x + b1) -
    ids = ids_ref[...]                                            # (n_step*B, 1) int32
    cls = jax.lax.broadcasted_iota(jnp.int32, (n_step * batch_size, n_class), 1)
    onehot = (cls == ids).astype(jnp.float32)                     # (n_step*B, n_class)
    xw_all = jnp.dot(onehot, T, preferred_element_type=jnp.float32)  # (n_step*B, 4H)

    # ---- Hoisted gate-activation lane constants ----------------------------
    # sigmoid(x) = 0.5*tanh(x/2) + 0.5  -> one tanh per 128-lane gate block.
    lane = jax.lax.broadcasted_iota(jnp.int32, (batch_size, G), 1)
    g_scale = jnp.where(lane < 3 * H, 0.5, 1.0)   # 0.5 on [F|I|O] lanes, 1.0 on C lanes
    g_shift = jnp.where(lane < 3 * H, 0.5, 0.0)   # 0.5 on [F|I|O] lanes, 0.0 on C lanes

    def gate_act(z):
        a = jnp.tanh(z * g_scale) * g_scale + g_shift
        return (a[:, 0:H], a[:, H:2 * H],
                a[:, 2 * H:3 * H], a[:, 3 * H:4 * H])             # f, i, o, c_bar

    zero = jnp.zeros((batch_size, H), jnp.float32)
    h1, c1, h2, c2 = zero, zero, zero, zero

    # ---- Fully unrolled recurrence ------------------------------------------
    for t in range(n_step):
        z1 = (jnp.dot(h1, w1h, preferred_element_type=jnp.float32)
              + xw_all[t * batch_size:(t + 1) * batch_size, :])
        f0, i0, o0, cb0 = gate_act(z1)
        c1 = f0 * c1 + i0 * cb0
        h1 = o0 * jnp.tanh(c1)

        # Split-W2: no per-step lane concat; h2_prev contribution is off the
        # h1 critical path; adjacent matmuls allow MRB accumulation on v7x.
        z2 = (jnp.dot(h2, w2h2, preferred_element_type=jnp.float32)
              + jnp.dot(h1, w2h1, preferred_element_type=jnp.float32)
              + b2)
        f1, i1, o1, cb1 = gate_act(z2)
        c2 = f1 * c2 + i1 * cb1
        h2 = o1 * jnp.tanh(c2)

    # Final projection of the last layer-2 hidden state (padded lanes are 0).
    logits = jnp.dot(h2, wout, preferred_element_type=jnp.float32) + bout  # (B, 128)
    out_ref[...] = logits[:, 0:n_class]


def pack_params(p):
    """Repack PyTorch-style per-gate Linear weights into a single lane-dense slab."""
    H = n_hidden
    f32 = jnp.float32

    # Layer 1 acts on concat(h, x): split each (H, H+E) weight into h/x parts,
    # transpose to (in, out), stack gates along the output (lane) axis.
    w1h = jnp.concatenate([p["W" + g][:, :H].T for g in GATE_ORDER_L1], axis=1)  # (H, 4H)
    w1x = jnp.concatenate([p["W" + g][:, H:].T for g in GATE_ORDER_L1], axis=1)  # (E, 4H)
    b1 = jnp.concatenate([p["b" + g] for g in GATE_ORDER_L1]).reshape(1, 4 * H)
    # Fold embedding + input projection + b1 into one lookup table.
    T = p["emb"].astype(f32) @ w1x + b1                                          # (n_class, 4H)

    # Layer 2 acts on concat(h_, h1): split weights so no concat is needed in-kernel.
    w2h2 = jnp.concatenate([p["W" + g][:, :H].T for g in GATE_ORDER_L2], axis=1)  # (H, 4H)
    w2h1 = jnp.concatenate([p["W" + g][:, H:].T for g in GATE_ORDER_L2], axis=1)  # (H, 4H)
    b2 = jnp.concatenate([p["b" + g] for g in GATE_ORDER_L2]).reshape(1, 4 * H)

    wout_p = jnp.zeros((H, GATE_LANES), f32).at[:, :n_class].set(p["Wout"].T)
    bout_p = jnp.zeros((1, GATE_LANES), f32).at[0, :n_class].set(p["bout"])

    slab = jnp.zeros((SLAB_ROWS, GATE_LANES), f32)
    slab = slab.at[R_T:R_T + n_class].set(T.astype(f32))
    slab = slab.at[R_W1H:R_W1H + H].set(w1h.astype(f32))
    slab = slab.at[R_W2H2:R_W2H2 + H].set(w2h2.astype(f32))
    slab = slab.at[R_W2H1:R_W2H1 + H].set(w2h1.astype(f32))
    slab = slab.at[R_B2:R_B2 + 1].set(b2.astype(f32))
    slab = slab.at[R_WOUT:R_WOUT + H].set(wout_p)
    slab = slab.at[R_BOUT:R_BOUT + 1].set(bout_p)
    return slab


def text_lstm_forward(x_tokens, slab):
    # Token ids, time-major, as a (n_step*batch, 1) int32 VMEM column.
    ids = jnp.transpose(x_tokens.astype(jnp.int32), (1, 0)).reshape(
        n_step * batch_size, 1)

    vmem = pl.BlockSpec(memory_space=pltpu.MemorySpace.VMEM)
    return pl.pallas_call(
        lstm_kernel,
        out_shape=jax.ShapeDtypeStruct((batch_size, n_class), jnp.float32),
        in_specs=[vmem, vmem],      # ids, packed parameter slab
        out_specs=vmem,
    )(ids, slab)


def ref_forward(x_tokens, p):
    """Pure-JAX reference mirroring the PyTorch forward exactly (per-gate Linears)."""
    X = p["emb"][x_tokens].astype(jnp.float32)
    X = jnp.transpose(X, (1, 0, 2))                         # (n_step, batch, emb)
    lin = lambda x, w, b: x @ w.T + b
    h = jnp.zeros((batch_size, n_hidden), jnp.float32)
    c = jnp.zeros_like(h)
    h_ = jnp.zeros_like(h)
    c_ = jnp.zeros_like(h)
    for t in range(n_step):
        hx0 = jnp.concatenate([h, X[t]], axis=1)
        f0 = jax.nn.sigmoid(lin(hx0, p["WF"], p["bF"]))
        i0 = jax.nn.sigmoid(lin(hx0, p["WI"], p["bI"]))
        cb0 = jnp.tanh(lin(hx0, p["WC"], p["bC"]))
        c = f0 * c + i0 * cb0
        o0 = jax.nn.sigmoid(lin(hx0, p["WO"], p["bO"]))
        h1 = o0 * jnp.tanh(c)
        hx1 = jnp.concatenate([h_, h1], axis=1)
        f1 = jax.nn.sigmoid(lin(hx1, p["WF_"], p["bF_"]))
        i1 = jax.nn.sigmoid(lin(hx1, p["WI_"], p["bI_"]))
        cb1 = jnp.tanh(lin(hx1, p["WC_"], p["bC_"]))
        c_ = f1 * c_ + i1 * cb1
        o1 = jax.nn.sigmoid(lin(hx1, p["WO_"], p["bO_"]))
        h_ = o1 * jnp.tanh(c_)
        h = h1
    return h_ @ p["Wout"].T + p["bout"]


def init_params(key):
    """PyTorch-style parameters (Linear stores (out, in) weight, (out,) bias)."""
    keys = jax.random.split(key, 19)
    ki = iter(keys)

    def linear(out_f, in_f):
        bound = 1.0 / (in_f ** 0.5)
        w = jax.random.uniform(next(ki), (out_f, in_f), jnp.float32, -bound, bound)
        b = jax.random.uniform(next(ki), (out_f,), jnp.float32, -bound, bound)
        return w, b

    p = {"emb": jax.random.normal(next(ki), (n_class, emb_size), jnp.float32)}
    for g in ("F", "I", "C", "O"):                     # Linear(H+E -> H)
        p["W" + g], p["b" + g] = linear(n_hidden, n_hidden + emb_size)
    for g in ("F_", "I_", "C_", "O_"):                 # Linear(2H -> H)
        p["W" + g], p["b" + g] = linear(n_hidden, 2 * n_hidden)
    p["Wout"], p["bout"] = linear(n_class, n_hidden)   # Linear(H -> n_class)
    return p


if __name__ == "__main__":
    key = jax.random.PRNGKey(0)
    pkey, xkey = jax.random.split(key)
    params = init_params(pkey)
    x_tokens = jax.random.randint(xkey, (batch_size, n_step), 0, n_class,
                                  dtype=jnp.int32)

    slab = pack_params(params)
    out = jax.block_until_ready(text_lstm_forward(x_tokens, slab))
    ref = ref_forward(x_tokens, params)

    assert out.shape == (batch_size, n_class)
    # tanh-form sigmoid + precomputed Emb@W1x table: identical math, a few ulps
    # of reassociation error -> compare at 1e-4.
    assert jnp.allclose(out, ref, atol=1e-4, rtol=1e-4), "mismatch vs reference"
    print("KERNEL_OK")
</pallas_src>

<mosaic_0001>
module attributes {stable_mosaic.version = 11 : i64} {
  func.func @lstm_kernel(%arg0: memref<10x1xi32, #tpu.memory_space<vmem>>, %arg1: memref<176x128xf32, #tpu.memory_space<vmem>>, %arg2: memref<2x32xf32, #tpu.memory_space<vmem>>) attributes {dimension_semantics = [], scalar_prefetch = 0 : i64, scratch_operands = 0 : i64, tpu.core_type = #tpu.core_type<tc>} {
    %c0 = arith.constant 0 : index
    %c0_0 = arith.constant 0 : index
    %0 = vector.load %arg1[%c0, %c0_0] : memref<176x128xf32, #tpu.memory_space<vmem>>, vector<32x128xf32>
    %c32 = arith.constant 32 : index
    %c0_1 = arith.constant 0 : index
    %1 = vector.load %arg1[%c32, %c0_1] : memref<176x128xf32, #tpu.memory_space<vmem>>, vector<32x128xf32>
    %c64 = arith.constant 64 : index
    %c0_2 = arith.constant 0 : index
    %2 = vector.load %arg1[%c64, %c0_2] : memref<176x128xf32, #tpu.memory_space<vmem>>, vector<32x128xf32>
    %c96 = arith.constant 96 : index
    %c0_3 = arith.constant 0 : index
    %3 = vector.load %arg1[%c96, %c0_3] : memref<176x128xf32, #tpu.memory_space<vmem>>, vector<32x128xf32>
    %c136 = arith.constant 136 : index
    %c0_4 = arith.constant 0 : index
    %4 = vector.load %arg1[%c136, %c0_4] : memref<176x128xf32, #tpu.memory_space<vmem>>, vector<32x128xf32>
    %c128 = arith.constant 128 : index
    %c0_5 = arith.constant 0 : index
    %5 = vector.load %arg1[%c128, %c0_5] : memref<176x128xf32, #tpu.memory_space<vmem>>, vector<1x128xf32>
    %6 = vector.shape_cast %5 : vector<1x128xf32> to vector<1x128xf32>
    %7 = vector.broadcast %6 : vector<1x128xf32> to vector<2x128xf32>
    %c168 = arith.constant 168 : index
    %c0_6 = arith.constant 0 : index
    %8 = vector.load %arg1[%c168, %c0_6] : memref<176x128xf32, #tpu.memory_space<vmem>>, vector<1x128xf32>
    %9 = vector.shape_cast %8 : vector<1x128xf32> to vector<1x128xf32>
    %10 = vector.broadcast %9 : vector<1x128xf32> to vector<2x128xf32>
    %c0_7 = arith.constant 0 : index
    %c0_8 = arith.constant 0 : index
    %11 = vector.load %arg0[%c0_7, %c0_8] : memref<10x1xi32, #tpu.memory_space<vmem>>, vector<10x1xi32>
    %12 = tpu.iota {dimensions = array<i32: 1>} : vector<10x32xi32>
    %13 = vector.broadcast %11 : vector<10x1xi32> to vector<10x32xi32>
    %14 = arith.cmpi eq, %12, %13 : vector<10x32xi32>
    %15 = arith.extui %14 : vector<10x32xi1> to vector<10x32xi32>
    %16 = arith.sitofp %15 : vector<10x32xi32> to vector<10x32xf32>
    %cst = arith.constant dense<0.000000e+00> : vector<10x128xf32>
    %17 = tpu.matmul %16, %0, %cst {dimension_numbers = #tpu.dot_dimension_numbers<[1], [0], [0], [1], [0, 0, 1, 1], [], []>} : vector<10x32xf32>, vector<32x128xf32>, vector<10x128xf32> -> vector<10x128xf32>
    %18 = tpu.iota {dimensions = array<i32: 1>} : vector<2x128xi32>
    %c96_i32 = arith.constant 96 : i32
    %19 = vector.broadcast %c96_i32 : i32 to vector<2x128xi32>
    %20 = arith.cmpi slt, %18, %19 : vector<2x128xi32>
    %cst_9 = arith.constant 5.000000e-01 : f32
    %cst_10 = arith.constant 1.000000e+00 : f32
    %21 = vector.broadcast %cst_9 : f32 to vector<2x128xf32>
    %22 = vector.broadcast %cst_10 : f32 to vector<2x128xf32>
    %23 = arith.select %20, %21, %22 : vector<2x128xi1>, vector<2x128xf32>
    %c96_i32_11 = arith.constant 96 : i32
    %24 = vector.broadcast %c96_i32_11 : i32 to vector<2x128xi32>
    %25 = arith.cmpi slt, %18, %24 : vector<2x128xi32>
    %cst_12 = arith.constant 5.000000e-01 : f32
    %cst_13 = arith.constant 0.000000e+00 : f32
    %26 = vector.broadcast %cst_12 : f32 to vector<2x128xf32>
    %27 = vector.broadcast %cst_13 : f32 to vector<2x128xf32>
    %28 = arith.select %25, %26, %27 : vector<2x128xi1>, vector<2x128xf32>
    %cst_14 = arith.constant 0.000000e+00 : f32
    %29 = vector.broadcast %cst_14 : f32 to vector<2x32xf32>
    %cst_15 = arith.constant dense<0.000000e+00> : vector<2x128xf32>
    %30 = tpu.matmul %29, %1, %cst_15 {dimension_numbers = #tpu.dot_dimension_numbers<[1], [0], [0], [1], [0, 0, 1, 1], [], []>} : vector<2x32xf32>, vector<32x128xf32>, vector<2x128xf32> -> vector<2x128xf32>
    %31 = vector.extract_strided_slice %17 {offsets = [0, 0], sizes = [2, 128], strides = [1, 1]} : vector<10x128xf32> to vector<2x128xf32>
    %32 = arith.addf %30, %31 : vector<2x128xf32>
    %33 = arith.mulf %32, %23 : vector<2x128xf32>
    %34 = math.tanh %33 : vector<2x128xf32>
    %35 = arith.mulf %34, %23 : vector<2x128xf32>
    %36 = arith.addf %35, %28 : vector<2x128xf32>
    %37 = vector.extract_strided_slice %36 {offsets = [0, 0], sizes = [2, 32], strides = [1, 1]} : vector<2x128xf32> to vector<2x32xf32>
    %38 = vector.extract_strided_slice %36 {offsets = [0, 32], sizes = [2, 32], strides = [1, 1]} : vector<2x128xf32> to vector<2x32xf32>
    %39 = vector.extract_strided_slice %36 {offsets = [0, 64], sizes = [2, 32], strides = [1, 1]} : vector<2x128xf32> to vector<2x32xf32>
    %40 = vector.extract_strided_slice %36 {offsets = [0, 96], sizes = [2, 32], strides = [1, 1]} : vector<2x128xf32> to vector<2x32xf32>
    %41 = arith.mulf %37, %29 : vector<2x32xf32>
    %42 = arith.mulf %38, %40 : vector<2x32xf32>
    %43 = arith.addf %41, %42 : vector<2x32xf32>
    %44 = math.tanh %43 : vector<2x32xf32>
    %45 = arith.mulf %39, %44 : vector<2x32xf32>
    %cst_16 = arith.constant dense<0.000000e+00> : vector<2x128xf32>
    %46 = tpu.matmul %29, %2, %cst_16 {dimension_numbers = #tpu.dot_dimension_numbers<[1], [0], [0], [1], [0, 0, 1, 1], [], []>} : vector<2x32xf32>, vector<32x128xf32>, vector<2x128xf32> -> vector<2x128xf32>
    %cst_17 = arith.constant dense<0.000000e+00> : vector<2x128xf32>
    %47 = tpu.matmul %45, %3, %cst_17 {dimension_numbers = #tpu.dot_dimension_numbers<[1], [0], [0], [1], [0, 0, 1, 1], [], []>} : vector<2x32xf32>, vector<32x128xf32>, vector<2x128xf32> -> vector<2x128xf32>
    %48 = arith.addf %46, %47 : vector<2x128xf32>
    %49 = arith.addf %48, %7 : vector<2x128xf32>
    %50 = arith.mulf %49, %23 : vector<2x128xf32>
    %51 = math.tanh %50 : vector<2x128xf32>
    %52 = arith.mulf %51, %23 : vector<2x128xf32>
    %53 = arith.addf %52, %28 : vector<2x128xf32>
    %54 = vector.extract_strided_slice %53 {offsets = [0, 0], sizes = [2, 32], strides = [1, 1]} : vector<2x128xf32> to vector<2x32xf32>
    %55 = vector.extract_strided_slice %53 {offsets = [0, 32], sizes = [2, 32], strides = [1, 1]} : vector<2x128xf32> to vector<2x32xf32>
    %56 = vector.extract_strided_slice %53 {offsets = [0, 64], sizes = [2, 32], strides = [1, 1]} : vector<2x128xf32> to vector<2x32xf32>
    %57 = vector.extract_strided_slice %53 {offsets = [0, 96], sizes = [2, 32], strides = [1, 1]} : vector<2x128xf32> to vector<2x32xf32>
    %58 = arith.mulf %54, %29 : vector<2x32xf32>
    %59 = arith.mulf %55, %57 : vector<2x32xf32>
    %60 = arith.addf %58, %59 : vector<2x32xf32>
    %61 = math.tanh %60 : vector<2x32xf32>
    %62 = arith.mulf %56, %61 : vector<2x32xf32>
    %cst_18 = arith.constant dense<0.000000e+00> : vector<2x128xf32>
    %63 = tpu.matmul %45, %1, %cst_18 {dimension_numbers = #tpu.dot_dimension_numbers<[1], [0], [0], [1], [0, 0, 1, 1], [], []>} : vector<2x32xf32>, vector<32x128xf32>, vector<2x128xf32> -> vector<2x128xf32>
    %64 = vector.extract_strided_slice %17 {offsets = [2, 0], sizes = [2, 128], strides = [1, 1]} : vector<10x128xf32> to vector<2x128xf32>
    %65 = arith.addf %63, %64 : vector<2x128xf32>
    %66 = arith.mulf %65, %23 : vector<2x128xf32>
    %67 = math.tanh %66 : vector<2x128xf32>
    %68 = arith.mulf %67, %23 : vector<2x128xf32>
    %69 = arith.addf %68, %28 : vector<2x128xf32>
    %70 = vector.extract_strided_slice %69 {offsets = [0, 0], sizes = [2, 32], strides = [1, 1]} : vector<2x128xf32> to vector<2x32xf32>
    %71 = vector.extract_strided_slice %69 {offsets = [0, 32], sizes = [2, 32], strides = [1, 1]} : vector<2x128xf32> to vector<2x32xf32>
    %72 = vector.extract_strided_slice %69 {offsets = [0, 64], sizes = [2, 32], strides = [1, 1]} : vector<2x128xf32> to vector<2x32xf32>
    %73 = vector.extract_strided_slice %69 {offsets = [0, 96], sizes = [2, 32], strides = [1, 1]} : vector<2x128xf32> to vector<2x32xf32>
    %74 = arith.mulf %70, %43 : vector<2x32xf32>
    %75 = arith.mulf %71, %73 : vector<2x32xf32>
    %76 = arith.addf %74, %75 : vector<2x32xf32>
    %77 = math.tanh %76 : vector<2x32xf32>
    %78 = arith.mulf %72, %77 : vector<2x32xf32>
    %cst_19 = arith.constant dense<0.000000e+00> : vector<2x128xf32>
    %79 = tpu.matmul %62, %2, %cst_19 {dimension_numbers = #tpu.dot_dimension_numbers<[1], [0], [0], [1], [0, 0, 1, 1], [], []>} : vector<2x32xf32>, vector<32x128xf32>, vector<2x128xf32> -> vector<2x128xf32>
    %cst_20 = arith.constant dense<0.000000e+00> : vector<2x128xf32>
    %80 = tpu.matmul %78, %3, %cst_20 {dimension_numbers = #tpu.dot_dimension_numbers<[1], [0], [0], [1], [0, 0, 1, 1], [], []>} : vector<2x32xf32>, vector<32x128xf32>, vector<2x128xf32> -> vector<2x128xf32>
    %81 = arith.addf %79, %80 : vector<2x128xf32>
    %82 = arith.addf %81, %7 : vector<2x128xf32>
    %83 = arith.mulf %82, %23 : vector<2x128xf32>
    %84 = math.tanh %83 : vector<2x128xf32>
    %85 = arith.mulf %84, %23 : vector<2x128xf32>
    %86 = arith.addf %85, %28 : vector<2x128xf32>
    %87 = vector.extract_strided_slice %86 {offsets = [0, 0], sizes = [2, 32], strides = [1, 1]} : vector<2x128xf32> to vector<2x32xf32>
    %88 = vector.extract_strided_slice %86 {offsets = [0, 32], sizes = [2, 32], strides = [1, 1]} : vector<2x128xf32> to vector<2x32xf32>
    %89 = vector.extract_strided_slice %86 {offsets = [0, 64], sizes = [2, 32], strides = [1, 1]} : vector<2x128xf32> to vector<2x32xf32>
    %90 = vector.extract_strided_slice %86 {offsets = [0, 96], sizes = [2, 32], strides = [1, 1]} : vector<2x128xf32> to vector<2x32xf32>
    %91 = arith.mulf %87, %60 : vector<2x32xf32>
    %92 = arith.mulf %88, %90 : vector<2x32xf32>
    %93 = arith.addf %91, %92 : vector<2x32xf32>
    %94 = math.tanh %93 : vector<2x32xf32>
    %95 = arith.mulf %89, %94 : vector<2x32xf32>
    %cst_21 = arith.constant dense<0.000000e+00> : vector<2x128xf32>
    %96 = tpu.matmul %78, %1, %cst_21 {dimension_numbers = #tpu.dot_dimension_numbers<[1], [0], [0], [1], [0, 0, 1, 1], [], []>} : vector<2x32xf32>, vector<32x128xf32>, vector<2x128xf32> -> vector<2x128xf32>
    %97 = vector.extract_strided_slice %17 {offsets = [4, 0], sizes = [2, 128], strides = [1, 1]} : vector<10x128xf32> to vector<2x128xf32>
    %98 = arith.addf %96, %97 : vector<2x128xf32>
    %99 = arith.mulf %98, %23 : vector<2x128xf32>
    %100 = math.tanh %99 : vector<2x128xf32>
    %101 = arith.mulf %100, %23 : vector<2x128xf32>
    %102 = arith.addf %101, %28 : vector<2x128xf32>
    %103 = vector.extract_strided_slice %102 {offsets = [0, 0], sizes = [2, 32], strides = [1, 1]} : vector<2x128xf32> to vector<2x32xf32>
    %104 = vector.extract_strided_slice %102 {offsets = [0, 32], sizes = [2, 32], strides = [1, 1]} : vector<2x128xf32> to vector<2x32xf32>
    %105 = vector.extract_strided_slice %102 {offsets = [0, 64], sizes = [2, 32], strides = [1, 1]} : vector<2x128xf32> to vector<2x32xf32>
    %106 = vector.extract_strided_slice %102 {offsets = [0, 96], sizes = [2, 32], strides = [1, 1]} : vector<2x128xf32> to vector<2x32xf32>
    %107 = arith.mulf %103, %76 : vector<2x32xf32>
    %108 = arith.mulf %104, %106 : vector<2x32xf32>
    %109 = arith.addf %107, %108 : vector<2x32xf32>
    %110 = math.tanh %109 : vector<2x32xf32>
    %111 = arith.mulf %105, %110 : vector<2x32xf32>
    %cst_22 = arith.constant dense<0.000000e+00> : vector<2x128xf32>
    %112 = tpu.matmul %95, %2, %cst_22 {dimension_numbers = #tpu.dot_dimension_numbers<[1], [0], [0], [1], [0, 0, 1, 1], [], []>} : vector<2x32xf32>, vector<32x128xf32>, vector<2x128xf32> -> vector<2x128xf32>
    %cst_23 = arith.constant dense<0.000000e+00> : vector<2x128xf32>
    %113 = tpu.matmul %111, %3, %cst_23 {dimension_numbers = #tpu.dot_dimension_numbers<[1], [0], [0], [1], [0, 0, 1, 1], [], []>} : vector<2x32xf32>, vector<32x128xf32>, vector<2x128xf32> -> vector<2x128xf32>
    %114 = arith.addf %112, %113 : vector<2x128xf32>
    %115 = arith.addf %114, %7 : vector<2x128xf32>
    %116 = arith.mulf %115, %23 : vector<2x128xf32>
    %117 = math.tanh %116 : vector<2x128xf32>
    %118 = arith.mulf %117, %23 : vector<2x128xf32>
    %119 = arith.addf %118, %28 : vector<2x128xf32>
    %120 = vector.extract_strided_slice %119 {offsets = [0, 0], sizes = [2, 32], strides = [1, 1]} : vector<2x128xf32> to vector<2x32xf32>
    %121 = vector.extract_strided_slice %119 {offsets = [0, 32], sizes = [2, 32], strides = [1, 1]} : vector<2x128xf32> to vector<2x32xf32>
    %122 = vector.extract_strided_slice %119 {offsets = [0, 64], sizes = [2, 32], strides = [1, 1]} : vector<2x128xf32> to vector<2x32xf32>
    %123 = vector.extract_strided_slice %119 {offsets = [0, 96], sizes = [2, 32], strides = [1, 1]} : vector<2x128xf32> to vector<2x32xf32>
    %124 = arith.mulf %120, %93 : vector<2x32xf32>
    %125 = arith.mulf %121, %123 : vector<2x32xf32>
    %126 = arith.addf %124, %125 : vector<2x32xf32>
    %127 = math.tanh %126 : vector<2x32xf32>
    %128 = arith.mulf %122, %127 : vector<2x32xf32>
    %cst_24 = arith.constant dense<0.000000e+00> : vector<2x128xf32>
    %129 = tpu.matmul %111, %1, %cst_24 {dimension_numbers = #tpu.dot_dimension_numbers<[1], [0], [0], [1], [0, 0, 1, 1], [], []>} : vector<2x32xf32>, vector<32x128xf32>, vector<2x128xf32> -> vector<2x128xf32>
    %130 = vector.extract_strided_slice %17 {offsets = [6, 0], sizes = [2, 128], strides = [1, 1]} : vector<10x128xf32> to vector<2x128xf32>
    %131 = arith.addf %129, %130 : vector<2x128xf32>
    %132 = arith.mulf %131, %23 : vector<2x128xf32>
    %133 = math.tanh %132 : vector<2x128xf32>
    %134 = arith.mulf %133, %23 : vector<2x128xf32>
    %135 = arith.addf %134, %28 : vector<2x128xf32>
    %136 = vector.extract_strided_slice %135 {offsets = [0, 0], sizes = [2, 32], strides = [1, 1]} : vector<2x128xf32> to vector<2x32xf32>
    %137 = vector.extract_strided_slice %135 {offsets = [0, 32], sizes = [2, 32], strides = [1, 1]} : vector<2x128xf32> to vector<2x32xf32>
    %138 = vector.extract_strided_slice %135 {offsets = [0, 64], sizes = [2, 32], strides = [1, 1]} : vector<2x128xf32> to vector<2x32xf32>
    %139 = vector.extract_strided_slice %135 {offsets = [0, 96], sizes = [2, 32], strides = [1, 1]} : vector<2x128xf32> to vector<2x32xf32>
    %140 = arith.mulf %136, %109 : vector<2x32xf32>
    %141 = arith.mulf %137, %139 : vector<2x32xf32>
    %142 = arith.addf %140, %141 : vector<2x32xf32>
    %143 = math.tanh %142 : vector<2x32xf32>
    %144 = arith.mulf %138, %143 : vector<2x32xf32>
    %cst_25 = arith.constant dense<0.000000e+00> : vector<2x128xf32>
    %145 = tpu.matmul %128, %2, %cst_25 {dimension_numbers = #tpu.dot_dimension_numbers<[1], [0], [0], [1], [0, 0, 1, 1], [], []>} : vector<2x32xf32>, vector<32x128xf32>, vector<2x128xf32> -> vector<2x128xf32>
    %cst_26 = arith.constant dense<0.000000e+00> : vector<2x128xf32>
    %146 = tpu.matmul %144, %3, %cst_26 {dimension_numbers = #tpu.dot_dimension_numbers<[1], [0], [0], [1], [0, 0, 1, 1], [], []>} : vector<2x32xf32>, vector<32x128xf32>, vector<2x128xf32> -> vector<2x128xf32>
    %147 = arith.addf %145, %146 : vector<2x128xf32>
    %148 = arith.addf %147, %7 : vector<2x128xf32>
    %149 = arith.mulf %148, %23 : vector<2x128xf32>
    %150 = math.tanh %149 : vector<2x128xf32>
    %151 = arith.mulf %150, %23 : vector<2x128xf32>
    %152 = arith.addf %151, %28 : vector<2x128xf32>
    %153 = vector.extract_strided_slice %152 {offsets = [0, 0], sizes = [2, 32], strides = [1, 1]} : vector<2x128xf32> to vector<2x32xf32>
    %154 = vector.extract_strided_slice %152 {offsets = [0, 32], sizes = [2, 32], strides = [1, 1]} : vector<2x128xf32> to vector<2x32xf32>
    %155 = vector.extract_strided_slice %152 {offsets = [0, 64], sizes = [2, 32], strides = [1, 1]} : vector<2x128xf32> to vector<2x32xf32>
    %156 = vector.extract_strided_slice %152 {offsets = [0, 96], sizes = [2, 32], strides = [1, 1]} : vector<2x128xf32> to vector<2x32xf32>
    %157 = arith.mulf %153, %126 : vector<2x32xf32>
    %158 = arith.mulf %154, %156 : vector<2x32xf32>
    %159 = arith.addf %157, %158 : vector<2x32xf32>
    %160 = math.tanh %159 : vector<2x32xf32>
    %161 = arith.mulf %155, %160 : vector<2x32xf32>
    %cst_27 = arith.constant dense<0.000000e+00> : vector<2x128xf32>
    %162 = tpu.matmul %144, %1, %cst_27 {dimension_numbers = #tpu.dot_dimension_numbers<[1], [0], [0], [1], [0, 0, 1, 1], [], []>} : vector<2x32xf32>, vector<32x128xf32>, vector<2x128xf32> -> vector<2x128xf32>
    %163 = vector.extract_strided_slice %17 {offsets = [8, 0], sizes = [2, 128], strides = [1, 1]} : vector<10x128xf32> to vector<2x128xf32>
    %164 = arith.addf %162, %163 : vector<2x128xf32>
    %165 = arith.mulf %164, %23 : vector<2x128xf32>
    %166 = math.tanh %165 : vector<2x128xf32>
    %167 = arith.mulf %166, %23 : vector<2x128xf32>
    %168 = arith.addf %167, %28 : vector<2x128xf32>
    %169 = vector.extract_strided_slice %168 {offsets = [0, 0], sizes = [2, 32], strides = [1, 1]} : vector<2x128xf32> to vector<2x32xf32>
    %170 = vector.extract_strided_slice %168 {offsets = [0, 32], sizes = [2, 32], strides = [1, 1]} : vector<2x128xf32> to vector<2x32xf32>
    %171 = vector.extract_strided_slice %168 {offsets = [0, 64], sizes = [2, 32], strides = [1, 1]} : vector<2x128xf32> to vector<2x32xf32>
    %172 = vector.extract_strided_slice %168 {offsets = [0, 96], sizes = [2, 32], strides = [1, 1]} : vector<2x128xf32> to vector<2x32xf32>
    %173 = arith.mulf %169, %142 : vector<2x32xf32>
    %174 = arith.mulf %170, %172 : vector<2x32xf32>
    %175 = arith.addf %173, %174 : vector<2x32xf32>
    %176 = math.tanh %175 : vector<2x32xf32>
    %177 = arith.mulf %171, %176 : vector<2x32xf32>
    %cst_28 = arith.constant dense<0.000000e+00> : vector<2x128xf32>
    %178 = tpu.matmul %161, %2, %cst_28 {dimension_numbers = #tpu.dot_dimension_numbers<[1], [0], [0], [1], [0, 0, 1, 1], [], []>} : vector<2x32xf32>, vector<32x128xf32>, vector<2x128xf32> -> vector<2x128xf32>
    %cst_29 = arith.constant dense<0.000000e+00> : vector<2x128xf32>
    %179 = tpu.matmul %177, %3, %cst_29 {dimension_numbers = #tpu.dot_dimension_numbers<[1], [0], [0], [1], [0, 0, 1, 1], [], []>} : vector<2x32xf32>, vector<32x128xf32>, vector<2x128xf32> -> vector<2x128xf32>
    %180 = arith.addf %178, %179 : vector<2x128xf32>
    %181 = arith.addf %180, %7 : vector<2x128xf32>
    %182 = arith.mulf %181, %23 : vector<2x128xf32>
    %183 = math.tanh %182 : vector<2x128xf32>
    %184 = arith.mulf %183, %23 : vector<2x128xf32>
    %185 = arith.addf %184, %28 : vector<2x128xf32>
    %186 = vector.extract_strided_slice %185 {offsets = [0, 0], sizes = [2, 32], strides = [1, 1]} : vector<2x128xf32> to vector<2x32xf32>
    %187 = vector.extract_strided_slice %185 {offsets = [0, 32], sizes = [2, 32], strides = [1, 1]} : vector<2x128xf32> to vector<2x32xf32>
    %188 = vector.extract_strided_slice %185 {offsets = [0, 64], sizes = [2, 32], strides = [1, 1]} : vector<2x128xf32> to vector<2x32xf32>
    %189 = vector.extract_strided_slice %185 {offsets = [0, 96], sizes = [2, 32], strides = [1, 1]} : vector<2x128xf32> to vector<2x32xf32>
    %190 = arith.mulf %186, %159 : vector<2x32xf32>
    %191 = arith.mulf %187, %189 : vector<2x32xf32>
    %192 = arith.addf %190, %191 : vector<2x32xf32>
    %193 = math.tanh %192 : vector<2x32xf32>
    %194 = arith.mulf %188, %193 : vector<2x32xf32>
    %cst_30 = arith.constant dense<0.000000e+00> : vector<2x128xf32>
    %195 = tpu.matmul %194, %4, %cst_30 {dimension_numbers = #tpu.dot_dimension_numbers<[1], [0], [0], [1], [0, 0, 1, 1], [], []>} : vector<2x32xf32>, vector<32x128xf32>, vector<2x128xf32> -> vector<2x128xf32>
    %196 = arith.addf %195, %10 : vector<2x128xf32>
    %197 = vector.extract_strided_slice %196 {offsets = [0, 0], sizes = [2, 32], strides = [1, 1]} : vector<2x128xf32> to vector<2x32xf32>
    %c0_31 = arith.constant 0 : index
    %c0_32 = arith.constant 0 : index
    %198 = vector.load %arg2[%c0_31, %c0_32] : memref<2x32xf32, #tpu.memory_space<vmem>>, vector<2x32xf32>
    tpu.vector_store %arg2[%c0_31, %c0_32], %197 {strides = array<i32>} : memref<2x32xf32, #tpu.memory_space<vmem>>, vector<2x32xf32>,
    return
  }
}

</mosaic_0001>

<llo_original>
// kernel: tpu_custom_call.1
$region0: #{tpu_custom_call.1}
  #allocation0 [shape = 'u32[]', space=smem, size = 0x4, offset = 0x4, fixed_abs, tag = 'smem constant byte address 0x4 - core index']
  #allocation1 [shape = 'u32[72,128]{1,0:T(1,128)}', space=vmem, size = 0x9000, scoped, tag = 'internal scratch']
  %s0 = inlined_call_operand.vmem [shape: s32[10,1], index: 0, kind: input, shape index: {}]
  %s1 = inlined_call_operand.hbm [shape: f32[176,128], index: 1, kind: input, shape index: {}]
  %s2 = inlined_call_operand.hbm [shape: f32[2,32], index: 2, kind: output, shape index: {}]
  %s3 = sld [smem:[#allocation0]]
  $region22: #{tpu_custom_call.1} parent=0
    _
  %s5 = ssub.s32 1, %s3
  %s6 = scalar_select 0, %s5, %s3
  $region1: #{tpu_custom_call.1} parent=0
    #allocation2 [shape = 'u8[90112]{0}', space=vmem, size = 0x16000, scoped, tag = 'input window, operand 1, single buffered']
    #allocation3 [shape = 's32[1]{0}', space=sflag, size = 0x4, scoped, tag = 'scoped memory for tpu_custom_call.1']
    #allocation4 [shape = 's32[1]{0}', space=sflag, size = 0x4, scoped, tag = 'scoped memory for tpu_custom_call.1']
    #allocation5 [shape = 'u8[1024]{0}', space=vmem, size = 0x400, scoped, tag = 'output window, operand 0, single buffered']
    %7 = vsyncpa [#allocation3], 0
    %8 = vsyncpa [#allocation4], 0
    // Predicated region
    $region2: #{tpu_custom_call.1} parent=1 // pred_check
      _
    $region3: #{tpu_custom_call.1} parent=1 // pred_check_branch
      %10 = sbr.rel (0) target = $region5
    $region4: #{tpu_custom_call.1} parent=1 // pred_region
      _
    $region5: #{tpu_custom_call.1} parent=1 // pred_fallthru
      _
    // Predicated region
    $region6: #{tpu_custom_call.1} parent=1 // pred_check
      _
    $region7: #{tpu_custom_call.1} parent=1 // pred_check_branch
      %12 = sbr.rel (0) target = $region9
    $region8: #{tpu_custom_call.1} parent=1 // pred_region
      %14 = vsyncadd [#allocation3], 0
      %s15 = sshll.u32 %s1, 4
      %s16 = int_to_ptr.hbm [resolvable:$true] %s15
      %s17 = sshll.u32 [#allocation2], 4
      %s18 = int_to_ptr.vmem [resolvable:$true] %s17
      %23 = dma.hbm_to_vmem [thread:$0]  %s16, 2816, %s18, [#allocation3], 128, 128, 8
    $region9: #{tpu_custom_call.1} parent=1 // pred_fallthru
      _
    // Predicated region
    $region10: #{tpu_custom_call.1} parent=1 // pred_check
      _
    $region11: #{tpu_custom_call.1} parent=1 // pred_check_branch
      %25 = sbr.rel (0) target = $region13
    $region12: #{tpu_custom_call.1} parent=1 // pred_region
      %27 = dma.done [#allocation3], 2816
    $region13: #{tpu_custom_call.1} parent=1 // pred_fallthru
      _
    %v28 = vld [vmem:[#allocation2] sm:$0xff]
    %v29 = vld [vmem:[#allocation2 + $0x8] sm:$0xff]
    %v30 = vld [vmem:[#allocation2 + $0x10] sm:$0xff]
    %v31 = vld [vmem:[#allocation2 + $0x18] sm:$0xff]
    %v32 = vld [vmem:[#allocation2 + $0x20] sm:$0xff]
    %v33 = vld [vmem:[#allocation2 + $0x28] sm:$0xff]
    %v34 = vld [vmem:[#allocation2 + $0x30] sm:$0xff]
    %v35 = vld [vmem:[#allocation2 + $0x38] sm:$0xff]
    %v36 = vld [vmem:[#allocation2 + $0x40] sm:$0xff]
    %v37 = vld [vmem:[#allocation2 + $0x48] sm:$0xff]
    %v38 = vld [vmem:[#allocation2 + $0x50] sm:$0xff]
    %v39 = vld [vmem:[#allocation2 + $0x58] sm:$0xff]
    %v40 = vld [vmem:[#allocation2 + $0x60] sm:$0xff]
    %v41 = vld [vmem:[#allocation2 + $0x68] sm:$0xff]
    %v42 = vld [vmem:[#allocation2 + $0x70] sm:$0xff]
    %v43 = vld [vmem:[#allocation2 + $0x78] sm:$0xff]
    %v44 = vld [vmem:[#allocation2 + $0x88] sm:$0xff]
    %v45 = vld [vmem:[#allocation2 + $0x90] sm:$0xff]
    %v46 = vld [vmem:[#allocation2 + $0x98] sm:$0xff]
    %v47 = vld [vmem:[#allocation2 + $0xa0] sm:$0xff]
    %v48 = vld [vmem:[#allocation2 + $0x80] sm:$0x1]
    %v49 = vperm.slane %v48, 0
    %v50 = vld [vmem:[#allocation2 + $0xa8] sm:$0x1]
    %v51 = vperm.slane %v50, 0
    %v52 = vld [vmem:[%s0] sm:$0xff]
    %v53 = vld [vmem:[%s0 + $0x8] sm:$0x3]
    %v54 = vlaneseq
    %v55 = vand.u32 %v54, 127
    %56 = vset.pattern.permute.xlu0 0
    %57 = vperm.xlu0 %56, %v52
    %v58 = vpop.permute.xlu0 %57
    %59 = vset.pattern.permute.xlu0 0
    %60 = vperm.xlu0 %59, %v53
    %v61 = vpop.permute.xlu0 %60
    %vm62 = vcmp.eq.s32.totalorder %v55, %v58
    %vm63 = vcmp.eq.s32.totalorder %v55, %v61
    %v64 = vsel %vm62, 1, 0
    %v65 = vsel %vm63, 1, 0
    %v66 = vcvt.s32.f32 %v64
    %v67 = vcvt.s32.f32 %v65
    %vm68 = vcmask 261120
    %v70 = vsel %vm68, %v66, 0
    %v73 = vsel %vm68, %v67, 0
    %75 = vmatpush.msra.mxu0 0.0
    %76 = vmatpush.msra.mxu0 0.0
    %77 = vmatpush.msra.mxu0 0.0
    %78 = vmatpush.msra.mxu0 0.0
    %79 = vmatpush.msra.mxu0 0.0
    %80 = vmatpush.msra.mxu0 0.0
    %81 = vmatpush.msra.mxu0 0.0
    %82 = vmatpush.msra.mxu0 0.0
    %83 = vmatpush.msra.mxu0 0.0
    %84 = vmatpush.msra.mxu0 0.0
    %85 = vmatpush.msra.mxu0 0.0
    %86 = vmatpush.msra.mxu0 0.0
    %87 = vmatpush.msra.mxu0 %v31
    %88 = vmatpush.msra.mxu0 %v30
    %89 = vmatpush.msra.mxu0 %v29
    %90 = vmatpush.msra.mxu0 %v28
    %91 = vmatmul.f32.gmra.mxu0 %v70
    %v92 = vpop.f32.mrf.mxu0
    %v93 = vadd.f32 0.0, %v92
    %94 = vmatmul.f32.gmra.mxu0 %v73
    %v95 = vpop.f32.mrf.mxu0
    %v96 = vadd.f32 0.0, %v95
    %97 = vdwg.mxu0
    %vm98 = vcmp.lt.s32.totalorder %v55, 96
    %v99 = vsel %vm98, 0.5, 1.0
    %v100 = vsel %vm98, 0.5, 0.0
    %v102 = vsel %vm68, 0.0, 0
    %104 = vmatpush.msra.mxu0 0.0
    %105 = vmatpush.msra.mxu0 0.0
    %106 = vmatpush.msra.mxu0 0.0
    %107 = vmatpush.msra.mxu0 0.0
    %108 = vmatpush.msra.mxu0 0.0
    %109 = vmatpush.msra.mxu0 0.0
    %110 = vmatpush.msra.mxu0 0.0
    %111 = vmatpush.msra.mxu0 0.0
    %112 = vmatpush.msra.mxu0 0.0
    %113 = vmatpush.msra.mxu0 0.0
    %114 = vmatpush.msra.mxu0 0.0
    %115 = vmatpush.msra.mxu0 0.0
    %116 = vmatpush.msra.mxu0 %v35
    %117 = vmatpush.msra.mxu0 %v34
    %118 = vmatpush.msra.mxu0 %v33
    %119 = vmatpush.msra.mxu0 %v32
    %120 = vmatmul.f32.gmra.mxu0 %v102
    %v121 = vpop.f32.mrf.mxu0
    %v122 = vadd.f32 %v93, %v121
    %123 = vdwg.mxu0
    %v124 = vmul.f32 %v122, %v99
    %v125 = vtanh.pop %v124
    %v126 = vmul.f32 %v125, %v99
    %v127 = vadd.f32 %v126, %v100
    %v128 = vmul.f32 %v127, 0.0
    %130 = vrot.lane.b32.xlu0 %v127, 64
    %v131 = vpop.permute.xlu0 %130
    %v133 = vmul.f32 %v127, %v131
    %135 = vrot.lane.b32.xlu0 %v133, 96
    %v136 = vpop.permute.xlu0 %135
    %v138 = vadd.f32 %v128, %v136
    %v139 = vtanh.pop %v138
    %141 = vrot.lane.b32.xlu0 %v139, 64
    %v142 = vpop.permute.xlu0 %141
    %v144 = vmul.f32 %v127, %v142
    %146 = vrot.lane.b32.xlu0 %v144, 64
    %v147 = vpop.permute.xlu0 %146
    %v148 = vsel %vm68, %v147, 0
    %150 = vmatpush.msra.mxu0 0.0
    %151 = vmatpush.msra.mxu0 0.0
    %152 = vmatpush.msra.mxu0 0.0
    %153 = vmatpush.msra.mxu0 0.0
    %154 = vmatpush.msra.mxu0 0.0
    %155 = vmatpush.msra.mxu0 0.0
    %156 = vmatpush.msra.mxu0 0.0
    %157 = vmatpush.msra.mxu0 0.0
    %158 = vmatpush.msra.mxu0 0.0
    %159 = vmatpush.msra.mxu0 0.0
    %160 = vmatpush.msra.mxu0 0.0
    %161 = vmatpush.msra.mxu0 0.0
    %162 = vmatpush.msra.mxu0 %v43
    %163 = vmatpush.msra.mxu0 %v42
    %164 = vmatpush.msra.mxu0 %v41
    %165 = vmatpush.msra.mxu0 %v40
    %166 = vmatmul.f32.gmra.mxu0 %v148
    %v167 = vpop.f32.mrf.mxu0
    %v168 = vadd.f32 0.0, %v167
    %169 = vdwg.mxu0
    %170 = vmatpush.msra.mxu0 0.0
    %171 = vmatpush.msra.mxu0 0.0
    %172 = vmatpush.msra.mxu0 0.0
    %173 = vmatpush.msra.mxu0 0.0
    %174 = vmatpush.msra.mxu0 0.0
    %175 = vmatpush.msra.mxu0 0.0
    %176 = vmatpush.msra.mxu0 0.0
    %177 = vmatpush.msra.mxu0 0.0
    %178 = vmatpush.msra.mxu0 0.0
    %179 = vmatpush.msra.mxu0 0.0
    %180 = vmatpush.msra.mxu0 0.0
    %181 = vmatpush.msra.mxu0 0.0
    %182 = vmatpush.msra.mxu0 %v39
    %183 = vmatpush.msra.mxu0 %v38
    %184 = vmatpush.msra.mxu0 %v37
    %185 = vmatpush.msra.mxu0 %v36
    %186 = vmatmul.f32.gmra.mxu0 %v102
    %v187 = vpop.f32.mrf.mxu0
    %v188 = vadd.f32 %v168, %v187
    %189 = vdwg.mxu0
    %v190 = vadd.f32 %v188, %v49
    %v191 = vmul.f32 %v190, %v99
    %v192 = vtanh.pop %v191
    %v193 = vmul.f32 %v192, %v99
    %v194 = vadd.f32 %v193, %v100
    %v195 = vmul.f32 %v194, 0.0
    %197 = vrot.lane.b32.xlu0 %v194, 64
    %v198 = vpop.permute.xlu0 %197
    %v200 = vmul.f32 %v194, %v198
    %202 = vrot.lane.b32.xlu0 %v200, 96
    %v203 = vpop.permute.xlu0 %202
    %v205 = vadd.f32 %v195, %v203
    %v206 = vtanh.pop %v205
    %208 = vrot.lane.b32.xlu0 %v206, 64
    %v209 = vpop.permute.xlu0 %208
    %v211 = vmul.f32 %v194, %v209
    %v213 = vrot.slane %v93, 2
    %215 = vmatpush.msra.mxu0 0.0
    %216 = vmatpush.msra.mxu0 0.0
    %217 = vmatpush.msra.mxu0 0.0
    %218 = vmatpush.msra.mxu0 0.0
    %219 = vmatpush.msra.mxu0 0.0
    %220 = vmatpush.msra.mxu0 0.0
    %221 = vmatpush.msra.mxu0 0.0
    %222 = vmatpush.msra.mxu0 0.0
    %223 = vmatpush.msra.mxu0 0.0
    %224 = vmatpush.msra.mxu0 0.0
    %225 = vmatpush.msra.mxu0 0.0
    %226 = vmatpush.msra.mxu0 0.0
    %227 = vmatpush.msra.mxu0 %v35
    %228 = vmatpush.msra.mxu0 %v34
    %229 = vmatpush.msra.mxu0 %v33
    %230 = vmatpush.msra.mxu0 %v32
    %231 = vmatmul.f32.gmra.mxu0 %v148
    %v232 = vpop.f32.mrf.mxu0
    %v233 = vadd.f32 %v213, %v232
    %234 = vdwg.mxu0
    %v235 = vmul.f32 %v233, %v99
    %v236 = vtanh.pop %v235
    %v237 = vmul.f32 %v236, %v99
    %v238 = vadd.f32 %v237, %v100
    %v239 = vmul.f32 %v238, %v138
    %241 = vrot.lane.b32.xlu0 %v238, 64
    %v242 = vpop.permute.xlu0 %241
    %v244 = vmul.f32 %v238, %v242
    %246 = vrot.lane.b32.xlu0 %v244, 96
    %v247 = vpop.permute.xlu0 %246
    %v249 = vadd.f32 %v239, %v247
    %v250 = vtanh.pop %v249
    %252 = vrot.lane.b32.xlu0 %v250, 64
    %v253 = vpop.permute.xlu0 %252
    %v255 = vmul.f32 %v238, %v253
    %257 = vrot.lane.b32.xlu0 %v255, 64
    %v258 = vpop.permute.xlu0 %257
    %v259 = vsel %vm68, %v258, 0
    %261 = vmatpush.msra.mxu0 0.0
    %262 = vmatpush.msra.mxu0 0.0
    %263 = vmatpush.msra.mxu0 0.0
    %264 = vmatpush.msra.mxu0 0.0
    %265 = vmatpush.msra.mxu0 0.0
    %266 = vmatpush.msra.mxu0 0.0
    %267 = vmatpush.msra.mxu0 0.0
    %268 = vmatpush.msra.mxu0 0.0
    %269 = vmatpush.msra.mxu0 0.0
    %270 = vmatpush.msra.mxu0 0.0
    %271 = vmatpush.msra.mxu0 0.0
    %272 = vmatpush.msra.mxu0 0.0
    %273 = vmatpush.msra.mxu0 %v43
    %274 = vmatpush.msra.mxu0 %v42
    %275 = vmatpush.msra.mxu0 %v41
    %276 = vmatpush.msra.mxu0 %v40
    %277 = vmatmul.f32.gmra.mxu0 %v259
    %v278 = vpop.f32.mrf.mxu0
    %v279 = vadd.f32 0.0, %v278
    %280 = vdwg.mxu0
    %282 = vrot.lane.b32.xlu0 %v211, 64
    %v283 = vpop.permute.xlu0 %282
    %v284 = vsel %vm68, %v283, 0
    %286 = vmatpush.msra.mxu0 0.0
    %287 = vmatpush.msra.mxu0 0.0
    %288 = vmatpush.msra.mxu0 0.0
    %289 = vmatpush.msra.mxu0 0.0
    %290 = vmatpush.msra.mxu0 0.0
    %291 = vmatpush.msra.mxu0 0.0
    %292 = vmatpush.msra.mxu0 0.0
    %293 = vmatpush.msra.mxu0 0.0
    %294 = vmatpush.msra.mxu0 0.0
    %295 = vmatpush.msra.mxu0 0.0
    %296 = vmatpush.msra.mxu0 0.0
    %297 = vmatpush.msra.mxu0 0.0
    %298 = vmatpush.msra.mxu0 %v39
    %299 = vmatpush.msra.mxu0 %v38
    %300 = vmatpush.msra.mxu0 %v37
    %301 = vmatpush.msra.mxu0 %v36
    %302 = vmatmul.f32.gmra.mxu0 %v284
    %v303 = vpop.f32.mrf.mxu0
    %v304 = vadd.f32 %v279, %v303
    %305 = vdwg.mxu0
    %v306 = vadd.f32 %v304, %v49
    %v307 = vmul.f32 %v306, %v99
    %v308 = vtanh.pop %v307
    %v309 = vmul.f32 %v308, %v99
    %v310 = vadd.f32 %v309, %v100
    %v311 = vmul.f32 %v310, %v205
    %313 = vrot.lane.b32.xlu0 %v310, 64
    %v314 = vpop.permute.xlu0 %313
    %v316 = vmul.f32 %v310, %v314
    %318 = vrot.lane.b32.xlu0 %v316, 96
    %v319 = vpop.permute.xlu0 %318
    %v321 = vadd.f32 %v311, %v319
    %v322 = vtanh.pop %v321
    %324 = vrot.lane.b32.xlu0 %v322, 64
    %v325 = vpop.permute.xlu0 %324
    %v327 = vmul.f32 %v310, %v325
    %v328 = vrot.slane %v93, 4
    %330 = vmatpush.msra.mxu0 0.0
    %331 = vmatpush.msra.mxu0 0.0
    %332 = vmatpush.msra.mxu0 0.0
    %333 = vmatpush.msra.mxu0 0.0
    %334 = vmatpush.msra.mxu0 0.0
    %335 = vmatpush.msra.mxu0 0.0
    %336 = vmatpush.msra.mxu0 0.0
    %337 = vmatpush.msra.mxu0 0.0
    %338 = vmatpush.msra.mxu0 0.0
    %339 = vmatpush.msra.mxu0 0.0
    %340 = vmatpush.msra.mxu0 0.0
    %341 = vmatpush.msra.mxu0 0.0
    %342 = vmatpush.msra.mxu0 %v35
    %343 = vmatpush.msra.mxu0 %v34
    %344 = vmatpush.msra.mxu0 %v33
    %345 = vmatpush.msra.mxu0 %v32
    %346 = vmatmul.f32.gmra.mxu0 %v259
    %v347 = vpop.f32.mrf.mxu0
    %v348 = vadd.f32 %v328, %v347
    %349 = vdwg.mxu0
    %v350 = vmul.f32 %v348, %v99
    %v351 = vtanh.pop %v350
    %v352 = vmul.f32 %v351, %v99
    %v353 = vadd.f32 %v352, %v100
    %v354 = vmul.f32 %v353, %v249
    %356 = vrot.lane.b32.xlu0 %v353, 64
    %v357 = vpop.permute.xlu0 %356
    %v359 = vmul.f32 %v353, %v357
    %361 = vrot.lane.b32.xlu0 %v359, 96
    %v362 = vpop.permute.xlu0 %361
    %v364 = vadd.f32 %v354, %v362
    %v365 = vtanh.pop %v364
    %367 = vrot.lane.b32.xlu0 %v365, 64
    %v368 = vpop.permute.xlu0 %367
    %v370 = vmul.f32 %v353, %v368
    %372 = vrot.lane.b32.xlu0 %v370, 64
    %v373 = vpop.permute.xlu0 %372
    %v374 = vsel %vm68, %v373, 0
    %376 = vmatpush.msra.mxu0 0.0
    %377 = vmatpush.msra.mxu0 0.0
    %378 = vmatpush.msra.mxu0 0.0
    %379 = vmatpush.msra.mxu0 0.0
    %380 = vmatpush.msra.mxu0 0.0
    %381 = vmatpush.msra.mxu0 0.0
    %382 = vmatpush.msra.mxu0 0.0
    %383 = vmatpush.msra.mxu0 0.0
    %384 = vmatpush.msra.mxu0 0.0
    %385 = vmatpush.msra.mxu0 0.0
    %386 = vmatpush.msra.mxu0 0.0
    %387 = vmatpush.msra.mxu0 0.0
    %388 = vmatpush.msra.mxu0 %v43
    %389 = vmatpush.msra.mxu0 %v42
    %390 = vmatpush.msra.mxu0 %v41
    %391 = vmatpush.msra.mxu0 %v40
    %392 = vmatmul.f32.gmra.mxu0 %v374
    %v393 = vpop.f32.mrf.mxu0
    %v394 = vadd.f32 0.0, %v393
    %395 = vdwg.mxu0
    %397 = vrot.lane.b32.xlu0 %v327, 64
    %v398 = vpop.permute.xlu0 %397
    %v399 = vsel %vm68, %v398, 0
    %401 = vmatpush.msra.mxu0 0.0
    %402 = vmatpush.msra.mxu0 0.0
    %403 = vmatpush.msra.mxu0 0.0
    %404 = vmatpush.msra.mxu0 0.0
    %405 = vmatpush.msra.mxu0 0.0
    %406 = vmatpush.msra.mxu0 0.0
    %407 = vmatpush.msra.mxu0 0.0
    %408 = vmatpush.msra.mxu0 0.0
    %409 = vmatpush.msra.mxu0 0.0
    %410 = vmatpush.msra.mxu0 0.0
    %411 = vmatpush.msra.mxu0 0.0
    %412 = vmatpush.msra.mxu0 0.0
    %413 = vmatpush.msra.mxu0 %v39
    %414 = vmatpush.msra.mxu0 %v38
    %415 = vmatpush.msra.mxu0 %v37
    %416 = vmatpush.msra.mxu0 %v36
    %417 = vmatmul.f32.gmra.mxu0 %v399
    %v418 = vpop.f32.mrf.mxu0
    %v419 = vadd.f32 %v394, %v418
    %420 = vdwg.mxu0
    %v421 = vadd.f32 %v419, %v49
    %v422 = vmul.f32 %v421, %v99
    %v423 = vtanh.pop %v422
    %v424 = vmul.f32 %v423, %v99
    %v425 = vadd.f32 %v424, %v100
    %v426 = vmul.f32 %v425, %v321
    %428 = vrot.lane.b32.xlu0 %v425, 64
    %v429 = vpop.permute.xlu0 %428
    %v431 = vmul.f32 %v425, %v429
    %433 = vrot.lane.b32.xlu0 %v431, 96
    %v434 = vpop.permute.xlu0 %433
    %v436 = vadd.f32 %v426, %v434
    %v437 = vtanh.pop %v436
    %439 = vrot.lane.b32.xlu0 %v437, 64
    %v440 = vpop.permute.xlu0 %439
    %v442 = vmul.f32 %v425, %v440
    %v443 = vrot.slane %v93, 6
    %445 = vmatpush.msra.mxu0 0.0
    %446 = vmatpush.msra.mxu0 0.0
    %447 = vmatpush.msra.mxu0 0.0
    %448 = vmatpush.msra.mxu0 0.0
    %449 = vmatpush.msra.mxu0 0.0
    %450 = vmatpush.msra.mxu0 0.0
    %451 = vmatpush.msra.mxu0 0.0
    %452 = vmatpush.msra.mxu0 0.0
    %453 = vmatpush.msra.mxu0 0.0
    %454 = vmatpush.msra.mxu0 0.0
    %455 = vmatpush.msra.mxu0 0.0
    %456 = vmatpush.msra.mxu0 0.0
    %457 = vmatpush.msra.mxu0 %v35
    %458 = vmatpush.msra.mxu0 %v34
    %459 = vmatpush.msra.mxu0 %v33
    %460 = vmatpush.msra.mxu0 %v32
    %461 = vmatmul.f32.gmra.mxu0 %v374
    %v462 = vpop.f32.mrf.mxu0
    %v463 = vadd.f32 %v443, %v462
    %464 = vdwg.mxu0
    %v465 = vmul.f32 %v463, %v99
    %v466 = vtanh.pop %v465
    %v467 = vmul.f32 %v466, %v99
    %v468 = vadd.f32 %v467, %v100
    %v469 = vmul.f32 %v468, %v364
    %471 = vrot.lane.b32.xlu0 %v468, 64
    %v472 = vpop.permute.xlu0 %471
    %v474 = vmul.f32 %v468, %v472
    %476 = vrot.lane.b32.xlu0 %v474, 96
    %v477 = vpop.permute.xlu0 %476
    %v479 = vadd.f32 %v469, %v477
    %v480 = vtanh.pop %v479
    %482 = vrot.lane.b32.xlu0 %v480, 64
    %v483 = vpop.permute.xlu0 %482
    %v485 = vmul.f32 %v468, %v483
    %487 = vrot.lane.b32.xlu0 %v485, 64
    %v488 = vpop.permute.xlu0 %487
    %v489 = vsel %vm68, %v488, 0
    %491 = vmatpush.msra.mxu0 0.0
    %492 = vmatpush.msra.mxu0 0.0
    %493 = vmatpush.msra.mxu0 0.0
    %494 = vmatpush.msra.mxu0 0.0
    %495 = vmatpush.msra.mxu0 0.0
    %496 = vmatpush.msra.mxu0 0.0
    %497 = vmatpush.msra.mxu0 0.0
    %498 = vmatpush.msra.mxu0 0.0
    %499 = vmatpush.msra.mxu0 0.0
    %500 = vmatpush.msra.mxu0 0.0
    %501 = vmatpush.msra.mxu0 0.0
    %502 = vmatpush.msra.mxu0 0.0
    %503 = vmatpush.msra.mxu0 %v43
    %504 = vmatpush.msra.mxu0 %v42
    %505 = vmatpush.msra.mxu0 %v41
    %506 = vmatpush.msra.mxu0 %v40
    %507 = vmatmul.f32.gmra.mxu0 %v489
    %v508 = vpop.f32.mrf.mxu0
    %v509 = vadd.f32 0.0, %v508
    %510 = vdwg.mxu0
    %512 = vrot.lane.b32.xlu0 %v442, 64
    %v513 = vpop.permute.xlu0 %512
    %v514 = vsel %vm68, %v513, 0
    %516 = vmatpush.msra.mxu0 0.0
    %517 = vmatpush.msra.mxu0 0.0
    %518 = vmatpush.msra.mxu0 0.0
    %519 = vmatpush.msra.mxu0 0.0
    %520 = vmatpush.msra.mxu0 0.0
    %521 = vmatpush.msra.mxu0 0.0
    %522 = vmatpush.msra.mxu0 0.0
    %523 = vmatpush.msra.mxu0 0.0
    %524 = vmatpush.msra.mxu0 0.0
    %525 = vmatpush.msra.mxu0 0.0
    %526 = vmatpush.msra.mxu0 0.0
    %527 = vmatpush.msra.mxu0 0.0
    %528 = vmatpush.msra.mxu0 %v39
    %529 = vmatpush.msra.mxu0 %v38
    %530 = vmatpush.msra.mxu0 %v37
    %531 = vmatpush.msra.mxu0 %v36
    %532 = vmatmul.f32.gmra.mxu0 %v514
    %v533 = vpop.f32.mrf.mxu0
    %v534 = vadd.f32 %v509, %v533
    %535 = vdwg.mxu0
    %v536 = vadd.f32 %v534, %v49
    %v537 = vmul.f32 %v536, %v99
    %v538 = vtanh.pop %v537
    %v539 = vmul.f32 %v538, %v99
    %v540 = vadd.f32 %v539, %v100
    %v541 = vmul.f32 %v540, %v436
    %543 = vrot.lane.b32.xlu0 %v540, 64
    %v544 = vpop.permute.xlu0 %543
    %v546 = vmul.f32 %v540, %v544
    %548 = vrot.lane.b32.xlu0 %v546, 96
    %v549 = vpop.permute.xlu0 %548
    %v551 = vadd.f32 %v541, %v549
    %v552 = vtanh.pop %v551
    %554 = vrot.lane.b32.xlu0 %v552, 64
    %v555 = vpop.permute.xlu0 %554
    %v557 = vmul.f32 %v540, %v555
    %558 = vmatpush.msra.mxu0 0.0
    %559 = vmatpush.msra.mxu0 0.0
    %560 = vmatpush.msra.mxu0 0.0
    %561 = vmatpush.msra.mxu0 0.0
    %562 = vmatpush.msra.mxu0 0.0
    %563 = vmatpush.msra.mxu0 0.0
    %564 = vmatpush.msra.mxu0 0.0
    %565 = vmatpush.msra.mxu0 0.0
    %566 = vmatpush.msra.mxu0 0.0
    %567 = vmatpush.msra.mxu0 0.0
    %568 = vmatpush.msra.mxu0 0.0
    %569 = vmatpush.msra.mxu0 0.0
    %570 = vmatpush.msra.mxu0 %v35
    %571 = vmatpush.msra.mxu0 %v34
    %572 = vmatpush.msra.mxu0 %v33
    %573 = vmatpush.msra.mxu0 %v32
    %574 = vmatmul.f32.gmra.mxu0 %v489
    %v575 = vpop.f32.mrf.mxu0
    %v576 = vadd.f32 %v96, %v575
    %577 = vdwg.mxu0
    %v578 = vmul.f32 %v576, %v99
    %v579 = vtanh.pop %v578
    %v580 = vmul.f32 %v579, %v99
    %v581 = vadd.f32 %v580, %v100
    %v582 = vmul.f32 %v581, %v479
    %584 = vrot.lane.b32.xlu0 %v581, 64
    %v585 = vpop.permute.xlu0 %584
    %v587 = vmul.f32 %v581, %v585
    %589 = vrot.lane.b32.xlu0 %v587, 96
    %v590 = vpop.permute.xlu0 %589
    %v592 = vadd.f32 %v582, %v590
    %v593 = vtanh.pop %v592
    %595 = vrot.lane.b32.xlu0 %v593, 64
    %v596 = vpop.permute.xlu0 %595
    %v598 = vmul.f32 %v581, %v596
    %600 = vrot.lane.b32.xlu0 %v598, 64
    %v601 = vpop.permute.xlu0 %600
    %v602 = vsel %vm68, %v601, 0
    %604 = vmatpush.msra.mxu0 0.0
    %605 = vmatpush.msra.mxu0 0.0
    %606 = vmatpush.msra.mxu0 0.0
    %607 = vmatpush.msra.mxu0 0.0
    %608 = vmatpush.msra.mxu0 0.0
    %609 = vmatpush.msra.mxu0 0.0
    %610 = vmatpush.msra.mxu0 0.0
    %611 = vmatpush.msra.mxu0 0.0
    %612 = vmatpush.msra.mxu0 0.0
    %613 = vmatpush.msra.mxu0 0.0
    %614 = vmatpush.msra.mxu0 0.0
    %615 = vmatpush.msra.mxu0 0.0
    %616 = vmatpush.msra.mxu0 %v43
    %617 = vmatpush.msra.mxu0 %v42
    %618 = vmatpush.msra.mxu0 %v41
    %619 = vmatpush.msra.mxu0 %v40
    %620 = vmatmul.f32.gmra.mxu0 %v602
    %v621 = vpop.f32.mrf.mxu0
    %v622 = vadd.f32 0.0, %v621
    %623 = vdwg.mxu0
    %625 = vrot.lane.b32.xlu0 %v557, 64
    %v626 = vpop.permute.xlu0 %625
    %v627 = vsel %vm68, %v626, 0
    %629 = vmatpush.msra.mxu0 0.0
    %630 = vmatpush.msra.mxu0 0.0
    %631 = vmatpush.msra.mxu0 0.0
    %632 = vmatpush.msra.mxu0 0.0
    %633 = vmatpush.msra.mxu0 0.0
    %634 = vmatpush.msra.mxu0 0.0
    %635 = vmatpush.msra.mxu0 0.0
    %636 = vmatpush.msra.mxu0 0.0
    %637 = vmatpush.msra.mxu0 0.0
    %638 = vmatpush.msra.mxu0 0.0
    %639 = vmatpush.msra.mxu0 0.0
    %640 = vmatpush.msra.mxu0 0.0
    %641 = vmatpush.msra.mxu0 %v39
    %642 = vmatpush.msra.mxu0 %v38
    %643 = vmatpush.msra.mxu0 %v37
    %644 = vmatpush.msra.mxu0 %v36
    %645 = vmatmul.f32.gmra.mxu0 %v627
    %v646 = vpop.f32.mrf.mxu0
    %v647 = vadd.f32 %v622, %v646
    %648 = vdwg.mxu0
    %v649 = vadd.f32 %v647, %v49
    %v650 = vmul.f32 %v649, %v99
    %v651 = vtanh.pop %v650
    %v652 = vmul.f32 %v651, %v99
    %v653 = vadd.f32 %v652, %v100
    %v654 = vmul.f32 %v653, %v551
    %656 = vrot.lane.b32.xlu0 %v653, 64
    %v657 = vpop.permute.xlu0 %656
    %v659 = vmul.f32 %v653, %v657
    %661 = vrot.lane.b32.xlu0 %v659, 96
    %v662 = vpop.permute.xlu0 %661
    %v664 = vadd.f32 %v654, %v662
    %v665 = vtanh.pop %v664
    %667 = vrot.lane.b32.xlu0 %v665, 64
    %v668 = vpop.permute.xlu0 %667
    %v670 = vmul.f32 %v653, %v668
    %672 = vrot.lane.b32.xlu0 %v670, 64
    %v673 = vpop.permute.xlu0 %672
    %v674 = vsel %vm68, %v673, 0
    %676 = vmatpush.msra.mxu0 0.0
    %677 = vmatpush.msra.mxu0 0.0
    %678 = vmatpush.msra.mxu0 0.0
    %679 = vmatpush.msra.mxu0 0.0
    %680 = vmatpush.msra.mxu0 0.0
    %681 = vmatpush.msra.mxu0 0.0
    %682 = vmatpush.msra.mxu0 0.0
    %683 = vmatpush.msra.mxu0 0.0
    %684 = vmatpush.msra.mxu0 0.0
    %685 = vmatpush.msra.mxu0 0.0
    %686 = vmatpush.msra.mxu0 0.0
    %687 = vmatpush.msra.mxu0 0.0
    %688 = vmatpush.msra.mxu0 %v47
    %689 = vmatpush.msra.mxu0 %v46
    %690 = vmatpush.msra.mxu0 %v45
    %691 = vmatpush.msra.mxu0 %v44
    %692 = vmatmul.f32.gmra.mxu0 %v674
    %v693 = vpop.f32.mrf.mxu0
    %v694 = vadd.f32 %v51, %v693
    %695 = vdwg.mxu0
    %vm696 = vcmask 254976
    %697 = vst.msk [vmem:[#allocation5] sm:$0x3] %vm696, %v694
    // Predicated region
    $region14: #{tpu_custom_call.1} parent=1 // pred_check
      _
    $region15: #{tpu_custom_call.1} parent=1 // pred_check_branch
      %699 = sbr.rel (0) target = $region17
    $region16: #{tpu_custom_call.1} parent=1 // pred_region
      %701 = vsyncadd [#allocation4], 0
      %s703 = sshll.u32 [#allocation5], 4
      %s704 = int_to_ptr.vmem [resolvable:$true] %s703
      %s705 = sshll.u32 %s2, 4
      %s706 = int_to_ptr.hbm [resolvable:$true] %s705
      %708 = dma.vmem_to_hbm [thread:$0]  %s704, 32, %s706, [#allocation4]
    $region17: #{tpu_custom_call.1} parent=1 // pred_fallthru
      _
    // Predicated region
    $region18: #{tpu_custom_call.1} parent=1 // pred_check
      _
    $region19: #{tpu_custom_call.1} parent=1 // pred_check_branch
      %710 = sbr.rel (0) target = $region21
    $region20: #{tpu_custom_call.1} parent=1 // pred_region
      %712 = dma.done [#allocation4], 32
    $region21: #{tpu_custom_call.1} parent=1 // pred_fallthru
      _
    %713 = vsyncpa [#allocation3], 1
    %714 = vsyncpa [#allocation4], 1

</llo_original>
